<compile_context>
chip_gen: v6e
topology: v6e:2x2x1
jax: 0.10.0
libtpu: 0.0.40
codegen_flags: <defaults>
</compile_context>

<pallas_src>
import functools
import math

import jax
import jax.numpy as jnp
import numpy as np
from jax.experimental import pallas as pl
from jax.experimental.pallas import tpu as pltpu


# ---------------------------------------------------------------------------
# Kernels
# ---------------------------------------------------------------------------

def _pe_dense_kernel(*refs, padding_idx, tile_s, left_pad):
    """D % 128 == 0 path: (batch_tile, tile_s, D) output blocks (lane-dense last dim)."""
    if left_pad:
        ids_ref, fp_ref, rowcoef_ref, out_ref = refs
    else:
        ids_ref, fp_ref, out_ref = refs

    ids = ids_ref[...]                                    # (B_t, T_s) int32
    mask = (ids != padding_idx)[:, :, None]               # (B_t, T_s, 1)
    inv_freq = fp_ref[0:1, :]                             # (1, D) = exp(-(d//2)*c1)
    phase = fp_ref[1:2, :]                                # (1, D) = 0 / pi/2 (cos(x)=sin(x+pi/2))

    si = pl.program_id(1)
    ts = ids.shape[1]
    j = jax.lax.broadcasted_iota(jnp.int32, (ts, 1), 0)   # (T_s, 1) local seq index
    jf = (j + si * tile_s).astype(jnp.float32)            # global seq index

    if not left_pad:
        # Non-pad positions depend only on the sequence index -> one (T_s, D) slab is shared
        # by all batch rows of this block (1 transcendental per element / batch_tile).
        slab = jnp.sin((jf + jnp.float32(padding_idx + 1)) * inv_freq + phase)
        val = slab[None, :, :]                            # (1, T_s, D)
    else:
        # positions = base_b + j;  angle-addition keeps the transcendentals batch-shared:
        #   sin((base_b + j)*f + ph) = sin(j*f+ph)*cos(base_b*f) + cos(j*f+ph)*sin(base_b*f)
        ang = jf * inv_freq + phase                       # (T_s, D)
        slab_sin = jnp.sin(ang)
        slab_cos = jnp.cos(ang)
        row_cos = rowcoef_ref[0]                          # (B_t, D) = cos(base_b * f)
        row_sin = rowcoef_ref[1]                          # (B_t, D) = sin(base_b * f)
        val = (slab_sin[None, :, :] * row_cos[:, None, :]
               + slab_cos[None, :, :] * row_sin[:, None, :])

    # Reference table row `padding_idx` is all zeros -> zero out pad slots.
    out_ref[...] = jnp.where(mask, val, jnp.float32(0.0)).astype(out_ref.dtype)


def _pe_flat_kernel(*refs, padding_idx, tile_s, left_pad):
    """D % 128 != 0 path: output viewed as (B, S*D); lane-dense (batch_tile, tile_s*D) blocks."""
    if left_pad:
        mask_ref, fp_ref, base_ref, out_ref = refs
    else:
        mask_ref, fp_ref, out_ref = refs

    flat_freq = fp_ref[0:1, :]                            # (1, L): f[m % D]
    flat_base = fp_ref[1:2, :]                            # (1, L): (m//D)*f[m%D] + phase[m%D]

    si = pl.program_id(1)
    seq_off = (si * tile_s).astype(jnp.float32)

    if not left_pad:
        # Batch-shared slab: 1 transcendental per (j, d) per grid step.
        p0 = jnp.float32(padding_idx + 1) + seq_off
        val = jnp.sin(p0 * flat_freq + flat_base)         # (1, L)
    else:
        # Per-row base position (precomputed in the wrapper); per-element sin.
        # TODO(synk): angle-addition here would need a period-D lane tiling of per-row
        # coefficients; kept at 1 sin/elem since this path only serves small D.
        base = base_ref[...] + seq_off                    # (B_t, 1)
        val = jnp.sin(base * flat_freq + flat_base)       # (B_t, L)

    maskf = mask_ref[...].astype(jnp.float32)             # (B_t, L) in {0.0, 1.0}
    out_ref[...] = (val * maskf).astype(out_ref.dtype)


# ---------------------------------------------------------------------------
# Tile selection
# ---------------------------------------------------------------------------

def _largest_aligned_divisor(n, cap, align):
    """Largest t with t <= cap, n % t == 0 and t % align == 0 (None if none exists)."""
    t = (min(cap, n) // align) * align
    while t >= align:
        if n % t == 0:
            return t
        t -= align
    return None


def _pick_tiles(B, S, D, tile_s, batch_tile, *, seq_align, batch_align, out_bytes, budget):
    """Largest tiles that keep the output block inside `budget` bytes, satisfy Mosaic
    alignment (tile % align == 0 or tile == full dim) and divide the array exactly."""
    row_bytes = max(D * out_bytes, 1)
    auto = tile_s is None and batch_tile is None
    user_ts = tile_s is not None

    if tile_s is None:
        cap = max(seq_align, budget // (row_bytes * min(max(B, 1), 8)))
        cap = min(cap, S)
        tile_s = S if S <= cap else (_largest_aligned_divisor(S, cap, seq_align) or S)

    if batch_tile is None:
        if B <= batch_align:
            batch_tile = B
        else:
            cap_b = max(batch_align,
                        (budget // max(tile_s * row_bytes, 1)) // batch_align * batch_align)
            batch_tile = _largest_aligned_divisor(B, min(B, cap_b), batch_align) or B

    # Safety: if the block still exceeds the budget (e.g. full-batch fallback), shrink tile_s.
    if not user_ts:
        while batch_tile * tile_s * row_bytes > budget and tile_s > seq_align:
            nxt = _largest_aligned_divisor(S, max(seq_align, tile_s // 2), seq_align)
            if nxt is None or nxt >= tile_s:
                break
            tile_s = nxt

    # v7x megacore: make sure both TensorCores get a block when the problem is big enough.
    if auto and (B // batch_tile) * (S // tile_s) < 2 \
            and batch_tile * tile_s * row_bytes >= (1 << 20):
        half_s, half_b = tile_s // 2, batch_tile // 2
        if half_s >= seq_align and half_s % seq_align == 0 and S % half_s == 0:
            tile_s = half_s
        elif half_b >= batch_align and half_b % batch_align == 0 and B % half_b == 0:
            batch_tile = half_b

    return tile_s, batch_tile


# ---------------------------------------------------------------------------
# Wrapper
# ---------------------------------------------------------------------------

def sinusoidal_positional_embedding(ids, embedding_dim, padding_idx=0, left_pad=False,
                                    tile_s=None, batch_tile=None, out_dtype=jnp.float32,
                                    block_budget_bytes=8 << 20, vmem_limit_bytes=32 << 20):
    """JAX/Pallas equivalent of SinusoidalPositionalEmbedding.forward.

    The kernel is purely output-write bound; pass out_dtype=jnp.bfloat16 when the consumer
    accepts it to halve the HBM traffic (~2x wall clock).
    """
    assert ids.ndim == 2, "input is expected to be [bsz, seq_len]"
    assert embedding_dim % 2 == 0 and embedding_dim >= 4, \
        "even embedding_dim >= 4 supported (half_dim - 1 must be > 0)"
    # TODO(synk): odd embedding_dim appends an extra zero column (output width D + 1) in the
    # reference module; not implemented here.

    B, S = ids.shape
    D = embedding_dim
    half_dim = D // 2
    emb_c1 = math.log(10000.0) / (half_dim - 1)
    out_bytes = jnp.dtype(out_dtype).itemsize

    # d-only math hoisted out of the kernel.
    d = jnp.arange(D, dtype=jnp.int32)
    inv_freq = jnp.exp((d // 2).astype(jnp.float32) * jnp.float32(-emb_c1))       # (D,)
    phase = jnp.where(d % 2 == 1, jnp.float32(math.pi / 2.0), jnp.float32(0.0))   # (D,)

    ids = ids.astype(jnp.int32)
    mask2d = ids != padding_idx

    lane_dense = (D % 128 == 0)
    seq_align = 128 if lane_dense else max(1, 128 // math.gcd(D, 128))
    batch_align = 8 if lane_dense else 32  # int8 mask blocks in the flat path pack 4x sublanes

    tile_s, batch_tile = _pick_tiles(
        B, S, D, tile_s, batch_tile, seq_align=seq_align, batch_align=batch_align,
        out_bytes=out_bytes, budget=block_budget_bytes)

    # Mosaic layout / exact-coverage constraints.
    assert tile_s == S or tile_s % seq_align == 0, \
        f"tile_s must be the full seq_len or a multiple of {seq_align}"
    assert S % tile_s == 0, "tile_s must divide seq_len"
    assert batch_tile == B or batch_tile % batch_align == 0, \
        f"batch_tile must be the full batch or a multiple of {batch_align}"
    assert B % batch_tile == 0, "batch_tile must divide bsz"

    grid = (B // batch_tile, S // tile_s)
    grid_b = grid[0]
    cparams = pltpu.CompilerParams(
        dimension_semantics=("parallel", "parallel"),
        vmem_limit_bytes=int(vmem_limit_bytes))

    if lane_dense:
        # ------------------------- dense path: D % 128 == 0 -------------------------
        fp = jnp.stack([inv_freq, phase], axis=0)                          # (2, D)
        operands = [ids, fp]
        in_specs = [
            pl.BlockSpec((batch_tile, tile_s), lambda bi, si: (bi, si)),
            pl.BlockSpec((2, D), lambda bi, si: (0, 0)),
        ]
        in_bytes = B * S * 4 + 2 * D * 4
        if left_pad:
            cnt = jnp.sum(mask2d, axis=1).astype(jnp.float32)              # (B,)
            base = jnp.float32(padding_idx + 1 - S) + cnt                  # (B,)
            bf = base[:, None] * inv_freq[None, :]                         # (B, D)
            rowcoef = jnp.stack([jnp.cos(bf), jnp.sin(bf)], axis=0)        # (2, B, D)
            operands.append(rowcoef)
            in_specs.append(pl.BlockSpec((2, batch_tile, D), lambda bi, si: (0, bi, 0)))
            in_bytes += 2 * B * D * 4

        kernel = functools.partial(_pe_dense_kernel, padding_idx=int(padding_idx),
                                   tile_s=int(tile_s), left_pad=bool(left_pad))
        cost = pl.CostEstimate(
            flops=int(B * S * D * (4 if left_pad else 2)),
            transcendentals=int(grid_b * S * D * (2 if left_pad else 1)),
            bytes_accessed=int(B * S * D * out_bytes + in_bytes))

        return pl.pallas_call(
            kernel,
            out_shape=jax.ShapeDtypeStruct((B, S, D), out_dtype),
            grid=grid,
            in_specs=in_specs,
            out_specs=pl.BlockSpec((batch_tile, tile_s, D), lambda bi, si: (bi, si, 0)),
            compiler_params=cparams,
            cost_estimate=cost,
        )(*operands)

    # ---------------- flat path: fold D into the lane axis (D % 128 != 0) ----------------
    L = tile_s * D
    m = jnp.arange(L, dtype=jnp.int32)
    dmod = m % D
    flat_freq = inv_freq[dmod]                                             # (L,)
    flat_base = (m // D).astype(jnp.float32) * flat_freq + phase[dmod]     # (L,)
    fp = jnp.stack([flat_freq, flat_base], axis=0)                         # (2, L)
    mask8 = jnp.broadcast_to(mask2d[:, :, None], (B, S, D)) \
               .reshape(B, S * D).astype(jnp.int8)                         # (B, S*D)

    operands = [mask8, fp]
    in_specs = [
        pl.BlockSpec((batch_tile, L), lambda bi, si: (bi, si)),
        pl.BlockSpec((2, L), lambda bi, si: (0, 0)),
    ]
    in_bytes = B * S * D + 2 * L * 4
    if left_pad:
        cnt = jnp.sum(mask2d, axis=1, keepdims=True).astype(jnp.float32)   # (B, 1)
        base = jnp.float32(padding_idx + 1 - S) + cnt                      # (B, 1)
        operands.append(base)
        in_specs.append(pl.BlockSpec((batch_tile, 1), lambda bi, si: (bi, 0)))
        in_bytes += B * 4

    kernel = functools.partial(_pe_flat_kernel, padding_idx=int(padding_idx),
                               tile_s=int(tile_s), left_pad=bool(left_pad))
    cost = pl.CostEstimate(
        flops=int(2 * B * S * D),
        transcendentals=int((B if left_pad else grid_b) * S * D),
        bytes_accessed=int(B * S * D * out_bytes + in_bytes))

    out = pl.pallas_call(
        kernel,
        out_shape=jax.ShapeDtypeStruct((B, S * D), out_dtype),
        grid=grid,
        in_specs=in_specs,
        out_specs=pl.BlockSpec((batch_tile, L), lambda bi, si: (bi, si)),
        compiler_params=cparams,
        cost_estimate=cost,
    )(*operands)
    return out.reshape(B, S, D)   # free: row-major (B, S*D) == (B, S, D)


# ---------------------------------------------------------------------------
# Reference + tests
# ---------------------------------------------------------------------------

def _reference(ids_np, embedding_dim, padding_idx=0, left_pad=False):
    """Pure numpy re-implementation of the PyTorch forward (table build + gather)."""
    bsz, seq_len = ids_np.shape
    max_pos = padding_idx + 1 + seq_len
    half_dim = embedding_dim // 2
    c1 = math.log(10000.0) / (half_dim - 1)
    d = np.arange(embedding_dim)
    table = (np.arange(max_pos, dtype=np.float32)[:, None]
             * np.exp((d // 2).astype(np.float32) * -c1)[None, :]).astype(np.float32)
    out_tbl = np.where(d % 2 == 0, np.sin(table), np.cos(table)).astype(np.float32)
    out_tbl[padding_idx, :] = 0.0

    mask = ids_np != padding_idx
    pos = padding_idx + 1 + np.arange(seq_len)[None, :].repeat(bsz, 0)
    if left_pad:
        pos = pos - seq_len + mask.sum(axis=1, keepdims=True)
    pos = np.where(mask, pos, padding_idx)
    return out_tbl[pos.reshape(-1)].reshape(bsz, seq_len, embedding_dim)


if __name__ == "__main__":
    pad = 0

    # Case 1: small D (flat lane-dense path), right padding, left_pad=False.
    B, S, D = 2, 8, 32
    ids = jax.random.randint(jax.random.PRNGKey(0), (B, S), 1, 100, dtype=jnp.int32)
    ids = ids.at[1, -3:].set(pad)
    out = jax.block_until_ready(
        sinusoidal_positional_embedding(ids, D, padding_idx=pad, left_pad=False))
    ref = _reference(np.asarray(ids), D, padding_idx=pad, left_pad=False)
    np.testing.assert_allclose(np.asarray(out), ref, atol=3e-4, rtol=1e-4)

    # Case 2: small D, left padding, left_pad=True (flat path, per-row base position).
    ids2 = jax.random.randint(jax.random.PRNGKey(1), (B, S), 1, 100, dtype=jnp.int32)
    ids2 = ids2.at[0, :2].set(pad)
    out2 = jax.block_until_ready(
        sinusoidal_positional_embedding(ids2, D, padding_idx=pad, left_pad=True))
    ref2 = _reference(np.asarray(ids2), D, padding_idx=pad, left_pad=True)
    np.testing.assert_allclose(np.asarray(out2), ref2, atol=3e-4, rtol=1e-4)

    # Case 3: lane-dense D (multiple of 128), real (batch, seq) grid, left_pad=False.
    B3, S3, D3 = 4, 256, 128
    ids3 = jax.random.randint(jax.random.PRNGKey(2), (B3, S3), 1, 100, dtype=jnp.int32)
    ids3 = ids3.at[2, -40:].set(pad)
    out3 = jax.block_until_ready(
        sinusoidal_positional_embedding(ids3, D3, padding_idx=pad, left_pad=False,
                                        tile_s=128))
    ref3 = _reference(np.asarray(ids3), D3, padding_idx=pad, left_pad=False)
    np.testing.assert_allclose(np.asarray(out3), ref3, atol=3e-4, rtol=1e-4)

    # Case 4: lane-dense D, left_pad=True (angle-addition path, batch-shared slab).
    ids4 = jax.random.randint(jax.random.PRNGKey(3), (B3, S3), 1, 100, dtype=jnp.int32)
    ids4 = ids4.at[1, :7].set(pad)
    ids4 = ids4.at[3, :128].set(pad)
    out4 = jax.block_until_ready(
        sinusoidal_positional_embedding(ids4, D3, padding_idx=pad, left_pad=True,
                                        tile_s=128))
    ref4 = _reference(np.asarray(ids4), D3, padding_idx=pad, left_pad=True)
    np.testing.assert_allclose(np.asarray(out4), ref4, atol=3e-4, rtol=1e-4)

    # Case 5: bf16 output (halves the HBM write traffic); loose tolerance vs f32 reference.
    out5 = jax.block_until_ready(
        sinusoidal_positional_embedding(ids3, D3, padding_idx=pad, left_pad=False,
                                        out_dtype=jnp.bfloat16))
    np.testing.assert_allclose(np.asarray(out5).astype(np.float32), ref3,
                               atol=2e-2, rtol=2e-2)

    print("KERNEL_OK")
</pallas_src>

<mosaic_0001>
module attributes {stable_mosaic.version = 11 : i64} {
  func.func @_pe_flat_kernel(%arg0: i32, %arg1: i32, %arg2: memref<2x256xi8, #tpu.memory_space<vmem>>, %arg3: memref<2x256xf32, #tpu.memory_space<vmem>>, %arg4: memref<2x256xf32, #tpu.memory_space<vmem>>) attributes {dimension_semantics = [#tpu.dimension_semantics<parallel>, #tpu.dimension_semantics<parallel>], iteration_bounds = array<i64: 1, 1>, scalar_prefetch = 0 : i64, scratch_operands = 0 : i64, tpu.core_type = #tpu.core_type<tc>, window_params = [{transform_indices = @transform_0, window_bounds = array<i64: 2, 256>}, {pipeline_mode = #tpu.pipeline_mode<synchronous>, transform_indices = @transform_1, window_bounds = array<i64: 2, 256>}, {transform_indices = @transform_2, window_bounds = array<i64: 2, 256>}]} {
    %c0 = arith.constant 0 : index
    %c0_0 = arith.constant 0 : index
    %0 = vector.load %arg3[%c0, %c0_0] : memref<2x256xf32, #tpu.memory_space<vmem>>, vector<1x256xf32>
    %c1 = arith.constant 1 : index
    %c0_1 = arith.constant 0 : index
    %1 = vector.load %arg3[%c1, %c0_1] : memref<2x256xf32, #tpu.memory_space<vmem>>, vector<1x256xf32>
    %c8_i32 = arith.constant 8 : i32
    %2 = arith.muli %arg1, %c8_i32 : i32
    %3 = arith.sitofp %2 : i32 to f32
    %cst = arith.constant 1.000000e+00 : f32
    %4 = arith.addf %cst, %3 : f32
    %5 = vector.broadcast %4 : f32 to vector<1x256xf32>
    %6 = arith.mulf %5, %0 : vector<1x256xf32>
    %7 = arith.addf %6, %1 : vector<1x256xf32>
    %8 = math.sin %7 : vector<1x256xf32>
    %c0_2 = arith.constant 0 : index
    %c0_3 = arith.constant 0 : index
    %9 = vector.load %arg2[%c0_2, %c0_3] : memref<2x256xi8, #tpu.memory_space<vmem>>, vector<2x256xi8>
    %10 = arith.sitofp %9 : vector<2x256xi8> to vector<2x256xf32>
    %11 = vector.broadcast %8 : vector<1x256xf32> to vector<2x256xf32>
    %12 = arith.mulf %11, %10 : vector<2x256xf32>
    %c0_4 = arith.constant 0 : index
    %c0_5 = arith.constant 0 : index
    %13 = vector.load %arg4[%c0_4, %c0_5] : memref<2x256xf32, #tpu.memory_space<vmem>>, vector<2x256xf32>
    tpu.vector_store %arg4[%c0_4, %c0_5], %12 {strides = array<i32>} : memref<2x256xf32, #tpu.memory_space<vmem>>, vector<2x256xf32>,
    return
  }
  func.func @transform_0(%arg0: i32, %arg1: i32) -> (i32, i32) {
    %c0_i32 = arith.constant 0 : i32
    return %arg0, %arg1 : i32, i32
  }
  func.func @transform_1(%arg0: i32, %arg1: i32) -> (i32, i32) {
    %c0_i32 = arith.constant 0 : i32
    %c0_i32_0 = arith.constant 0 : i32
    %c0_i32_1 = arith.constant 0 : i32
    return %c0_i32, %c0_i32_0 : i32, i32
  }
  func.func @transform_2(%arg0: i32, %arg1: i32) -> (i32, i32) {
    %c0_i32 = arith.constant 0 : i32
    return %arg0, %arg1 : i32, i32
  }
}

</mosaic_0001>

<llo_original>
// kernel: tpu_custom_call.1
$region0: #{tpu_custom_call.1}
  #allocation0 [shape = 'u32[]', space=smem, size = 0x4, offset = 0x4, fixed_abs, tag = 'smem constant byte address 0x4 - core index']
  #allocation1 [shape = 'u32[144,128]{1,0:T(1,128)}', space=vmem, size = 0x12000, scoped, tag = 'internal scratch']
  %s0 = inlined_call_operand.hbm [shape: s8[2,256], index: 0, kind: input, shape index: {}]
  %s1 = inlined_call_operand.hbm [shape: f32[2,256], index: 1, kind: input, shape index: {}]
  %s2 = inlined_call_operand.hbm [shape: f32[2,256], index: 2, kind: output, shape index: {}]
  %s3 = sld [smem:[#allocation0]]
  $region26: #{tpu_custom_call.1} parent=0
    _
  %s5 = ssub.s32 1, %s3
  %s6 = scalar_select 0, %s5, %s3
  $region1: #{tpu_custom_call.1} parent=0
    #allocation2 [shape = 'u8[1024]{0}', space=vmem, size = 0x400, scoped, tag = 'input window, operand 0, single buffered']
    #allocation3 [shape = 's32[1]{0}', space=sflag, size = 0x4, scoped, tag = 'scoped memory for tpu_custom_call.1']
    #allocation4 [shape = 's32[1]{0}', space=sflag, size = 0x4, scoped, tag = 'scoped memory for tpu_custom_call.1']
    #allocation5 [shape = 'u8[2048]{0}', space=vmem, size = 0x800, scoped, tag = 'input window, operand 1, single buffered']
    #allocation6 [shape = 's32[1]{0}', space=sflag, size = 0x4, scoped, tag = 'scoped memory for tpu_custom_call.1']
    #allocation7 [shape = 'u8[2048]{0}', space=vmem, size = 0x800, scoped, tag = 'output window, operand 0, single buffered']
    %7 = vsyncpa [#allocation3], 0
    %8 = vsyncpa [#allocation6], 0
    %9 = vsyncpa [#allocation4], 0
    // Predicated region
    $region2: #{tpu_custom_call.1} parent=1 // pred_check
      _
    $region3: #{tpu_custom_call.1} parent=1 // pred_check_branch
      %11 = sbr.rel (0) target = $region5
    $region4: #{tpu_custom_call.1} parent=1 // pred_region
      %s13 = ssub.s32 32, 32
      %14 = vsyncadd [#allocation3], %s13
      %s16 = sshll.u32 [#allocation2], 4
      %s17 = int_to_ptr.vmem [resolvable:$true] %s16
      %19 = dma.hbm_to_vmem [thread:$0]  %s0, 32, %s17, [#allocation3]
    $region5: #{tpu_custom_call.1} parent=1 // pred_fallthru
      _
    // Predicated region
    $region6: #{tpu_custom_call.1} parent=1 // pred_check
      _
    $region7: #{tpu_custom_call.1} parent=1 // pred_check_branch
      %21 = sbr.rel (0) target = $region9
    $region8: #{tpu_custom_call.1} parent=1 // pred_region
      %s23 = ssub.s32 64, 64
      %24 = vsyncadd [#allocation6], %s23
      %s26 = sshll.u32 [#allocation5], 4
      %s27 = int_to_ptr.vmem [resolvable:$true] %s26
      %29 = dma.hbm_to_vmem [thread:$0]  %s1, 64, %s27, [#allocation6]
    $region9: #{tpu_custom_call.1} parent=1 // pred_fallthru
      _
    // Predicated region
    $region10: #{tpu_custom_call.1} parent=1 // pred_check
      _
    $region11: #{tpu_custom_call.1} parent=1 // pred_check_branch
      %31 = sbr.rel (0) target = $region13
    $region12: #{tpu_custom_call.1} parent=1 // pred_region
      %32 = dma.done [#allocation3], 32
    $region13: #{tpu_custom_call.1} parent=1 // pred_fallthru
      _
    // Predicated region
    $region14: #{tpu_custom_call.1} parent=1 // pred_check
      _
    $region15: #{tpu_custom_call.1} parent=1 // pred_check_branch
      %34 = sbr.rel (0) target = $region17
    $region16: #{tpu_custom_call.1} parent=1 // pred_region
      %35 = dma.done [#allocation6], 64
    $region17: #{tpu_custom_call.1} parent=1 // pred_fallthru
      _
    %v36 = vld [vmem:[#allocation5] ss:$2 sm:$0x3]
    %s37 = scalar_lea.vmem [#allocation5], 1
    %v38 = vld [vmem:[%s37] ss:$2 sm:$0x3]
    %s39 = smul.u32 0, 8
    %s40 = scvt.s32.f32 %s39
    %s41 = sadd.f32 %s40, 1.0
    %v42 = vstv %s41
    %v43 = vmul.f32 %v42, %v36
    %v44 = vadd.f32 %v43, %v38
    %v45 = vand.u32 2147483647, %v44
    %vm46 = vcmp.le.f32.partialorder %v45, 0.7853982
    %vm47 = vcmp.lt.s32.totalorder %v44, 0
    %v48 = vand.u32 %v44, 2139095040
    %v49 = vshrl.u32 %v48, 23
    %v50 = vsub.s32 %v49, 127
    %v51 = vand.u32 2147483647, %v44
    %v52 = vand.u32 %v51, 8388607
    %v53 = vor.u32 %v52, 8388608
    %v54 = vsub.s32 0, %v53
    %v55 = vadd.s32 %v50, 1
    %vm56 = vcmp.gt.s32.totalorder %v55, 0
    %v57 = vsel %vm56, %v55, 0
    %v58 = vshrl.u32 %v57, 5
    %v59 = vand.u32 %v57, 31
    %v60 = vsub.s32 32, %v59
    %v61 = vshrl.u32 683565275, %v60
    %v62 = vshll.u32 683565275, %v59
    %v63 = vshrl.u32 2475754826, %v60
    %v64 = vor.u32 %v62, %v63
    %v65 = vshll.u32 2475754826, %v59
    %v66 = vshrl.u32 2131351028, %v60
    %v67 = vor.u32 %v65, %v66
    %v68 = vshll.u32 2131351028, %v59
    %v69 = vshrl.u32 2102212464, %v60
    %v70 = vor.u32 %v68, %v69
    %v71 = vshll.u32 2102212464, %v59
    %v72 = vshrl.u32 920167782, %v60
    %v73 = vor.u32 %v71, %v72
    %v74 = vshll.u32 920167782, %v59
    %v75 = vshrl.u32 1326507024, %v60
    %v76 = vor.u32 %v74, %v75
    %vm77 = vcmp.lt.s32.totalorder %v58, 1
    %vm78 = vcmp.lt.s32.totalorder %v58, 2
    %vm79 = vcmp.lt.s32.totalorder %v58, 3
    %vm80 = vcmp.lt.s32.totalorder %v58, 4
    %v81 = vsel %vm77, %v61, %v64
    %v82 = vsel %vm80, %v70, 2102212464
    %v83 = vsel %vm79, %v67, %v82
    %v84 = vsel %vm78, %v81, %v83
    %v85 = vsel %vm77, %v64, %v67
    %v86 = vsel %vm80, %v73, 920167782
    %v87 = vsel %vm79, %v70, %v86
    %v88 = vsel %vm78, %v85, %v87
    %v89 = vsel %vm77, %v67, %v70
    %v90 = vsel %vm80, %v76, 1326507024
    %v91 = vsel %vm79, %v73, %v90
    %v92 = vsel %vm78, %v89, %v91
    %v93 = vshll.u32 %v53, 8
    %v94 = vmul.u32.u64.compose %v93, %v92
    %v95 = vextract.low.u32 %v94
    %v96 = vextract.high.u32 %v94
    %v97 = vmul.u32.u64.compose %v93, %v88
    %v98 = vextract.low.u32 %v97
    %v99 = vextract.high.u32 %v97
    %v100 = vmul.u32 %v93, %v84
    %v101 = vadd.s32 %v96, %v98
    %vm102 = vc.u32 %v96, %v98
    %v103 = vadd.s32 %v99, 1
    %v104 = vsel %vm102, %v103, %v99
    %v105 = vadd.s32 %v100, %v104
    %v106 = vadd.s32 %v105, 536870912
    %v107 = vshrl.u32 %v106, 30
    %v108 = vshll.u32 %v107, 30
    %v109 = vsub.s32 %v105, %v108
    %vm110 = vcmp.lt.s32.totalorder %v109, 0
    %v111 = vsub.s32 0, %v109
    %v112 = vsel %vm110, %v111, %v109
    %v113 = vclz %v112
    %v114 = vsub.s32 %v113, 2
    %vm115 = vcmp.gt.s32.totalorder 0, %v114
    %v116 = vsel %vm115, 0, %v114
    %v117 = vsub.s32 32, %v116
    %v118 = vshll.u32 %v109, %v116
    %v119 = vshrl.u32 %v101, %v117
    %v120 = vor.u32 %v118, %v119
    %v121 = vsub.s32 4294967266, %v116
    %v122 = vadd.s32 %v121, 127
    %v123 = vshll.u32 %v122, 23
    %v124 = vor.u32 4788187, %v123
    %v125 = vand.u32 2147483647, %v124
    %v127 = vcvt.s32.f32 %v120
    %v128 = vmul.f32 %v127, %v125
    %v129 = vxor.u32 %v128, 2147483648
    %v130 = vsel %vm47, %v129, %v128
    %v131 = vsub.s32 4, %v107
    %v132 = vsel %vm47, %v131, %v107
    %v133 = vsel %vm46, %v44, %v130
    %v134 = vsel %vm46, 0, %v132
    %v135 = vcosq.f32.pop %v133
    %v136 = vsinq.f32.pop %v133
    %vm137 = vweird.f32 %v44
    %v138 = vadd.s32 %v134, 3
    %v139 = vand.u32 %v138, 3
    %vm140 = vcmp.lt.s32.totalorder %v139, 2
    %vm141 = vcmp.eq.s32.totalorder %v139, 0
    %v142 = vxor.u32 %v136, 2147483648
    %v143 = vsel %vm141, %v135, %v142
    %vm144 = vcmp.eq.s32.totalorder %v139, 2
    %v145 = vxor.u32 %v135, 2147483648
    %v146 = vsel %vm144, %v145, %v136
    %v147 = vsel %vm140, %v143, %v146
    %v148 = vsel %vm137, nan, %v147
    %v149 = vld [vmem:[#allocation2] sm:$0x3]
    %v150 = vunpack.c.0.s8 %v149
    %v151 = vcvt.s32.f32 %v150
    %v153 = vlaneseq
    %v154 = vshrl.u32 %v153, 7
    %v155 = vsub.s32 0, %v154
    %v156 = vrot.slane %v148, %v155
    %v157 = vlaneseq
    %v158 = vshrl.u32 %v157, 7
    %v159 = vsub.s32 1, %v158
    %v160 = vrot.slane %v148, %v159
    %v164 = vcombine.high %v151, %v151
    %v166 = vmul.f32 %v156, %v151
    %v167 = vmul.f32 %v160, %v164
    %v170 = vcombine.low %v166, %v167
    %v172 = vunpack.c.l.s4 1983009808
    %v173 = vunpack.c.0.s8 %v172
    %v174 = vlaneseq
    %v175 = vshrl.u32 %v174, 7
    %v176 = vsub.s32 %v173, %v175
    %v177 = vrot.slane %v170, %v176
    %179 = vst [vmem:[#allocation7] sm:$0xf] %v177
    // Predicated region
    $region18: #{tpu_custom_call.1} parent=1 // pred_check
      _
    $region19: #{tpu_custom_call.1} parent=1 // pred_check_branch
      %181 = sbr.rel (0) target = $region21
    $region20: #{tpu_custom_call.1} parent=1 // pred_region
      %s183 = ssub.s32 64, 64
      %184 = vsyncadd [#allocation4], %s183
      %s186 = sshll.u32 [#allocation7], 4
      %s187 = int_to_ptr.vmem [resolvable:$true] %s186
      %189 = dma.vmem_to_hbm [thread:$0]  %s187, 64, %s2, [#allocation4]
    $region21: #{tpu_custom_call.1} parent=1 // pred_fallthru
      _
    // Predicated region
    $region22: #{tpu_custom_call.1} parent=1 // pred_check
      _
    $region23: #{tpu_custom_call.1} parent=1 // pred_check_branch
      %191 = sbr.rel (0) target = $region25
    $region24: #{tpu_custom_call.1} parent=1 // pred_region
      %192 = dma.done [#allocation4], 64
    $region25: #{tpu_custom_call.1} parent=1 // pred_fallthru
      _
    %193 = vsyncpa [#allocation3], 1
    %194 = vsyncpa [#allocation6], 1
    %195 = vsyncpa [#allocation4], 1

</llo_original>
